<compile_context>
chip_gen: v7x
topology: tpu7x:2x2x1
jax: 0.10.0
libtpu: 0.0.40
codegen_flags: <defaults>
</compile_context>

<pallas_src>
import functools

import jax
import jax.numpy as jnp
from jax import lax
from jax.experimental import pallas as pl
from jax.experimental.pallas import tpu as pltpu

NUM_CLASSES = 10
_LANE = 128
_MAX_TB = 32768  # upper bound on batch-tile lanes (fully amortizes per-step overhead)


def _vmem_capacity_bytes():
    """Physical VMEM of the local TPU generation (conservative 64 MiB fallback)."""
    try:
        info = pltpu.get_tpu_info()
        for name in ("vmem_capacity_bytes", "vmem_bytes", "vmem_capacity"):
            cap = getattr(info, name, None)
            if cap:
                return int(cap)
    except Exception:
        pass
    return 64 * 1024 * 1024


def _round_up(x, m):
    return ((x + m - 1) // m) * m


def _make_loss_kernel(*, smooth, scale, eps, lam, regularization, b, f_dim, tb,
                      s_per_chunk, needs_mask, flat_feats, rows_per_block,
                      total_feat_rows):
    """Builds the fused loss kernel with all static config baked in."""
    has_feat = regularization in (1, 2)
    inv_b = 1.0 / float(b)
    reg_scale = float(lam) / (float(b) * float(f_dim)) if has_feat else 0.0

    # Static smoothing weights: soft = w_on * onehot + w_off * (1 - onehot).
    # (total == 1 for index targets, so the reference divisions by `total` fold away.)
    if smooth == 0:
        w_on, w_off = 1.0, 0.0
    elif smooth == 1:
        w_on, w_off = float(scale), 0.0
    elif smooth == 2:
        w_on, w_off = 1.0 - float(eps), float(eps) / 10.0
    else:  # pragma: no cover - guarded in the wrapper
        raise NotImplementedError

    def kernel(logits_ref, tgt_ref, *rest):
        if has_feat:
            feat_ref, out_ref, loss_acc, reg_acc = rest
        else:
            feat_ref, reg_acc = None, None
            out_ref, loss_acc = rest

        p = pl.program_id(0)              # parallel chunk (megacore on v7x)
        s = pl.program_id(1)              # sequential step within the chunk
        blk = p * s_per_chunk + s         # global batch-block index

        @pl.when(s == 0)
        def _init():
            loss_acc[...] = jnp.zeros_like(loss_acc)
            if has_feat:
                reg_acc[...] = jnp.zeros_like(reg_acc)

        # ---- smoothed cross-entropy on the (C, TB) tile ---------------------
        logits = logits_ref[...].astype(jnp.float32)              # (C, TB)
        tgt = tgt_ref[...]                                         # (1, TB) int32

        cls = lax.broadcasted_iota(jnp.int32, logits.shape, 0)
        onehot = (cls == tgt).astype(jnp.float32)                  # (C, TB)

        m = jnp.max(logits, axis=0, keepdims=True)                 # (1, TB)
        sum_exp = jnp.sum(jnp.exp(logits - m), axis=0, keepdims=True)
        lse = m + jnp.log(sum_exp)                                 # full log-sum-exp
        logit_t = jnp.sum(logits * onehot, axis=0, keepdims=True)  # logit at target

        # Closed form of -sum(log_softmax * soft):
        ce = (w_on - w_off) * (lse - logit_t)                      # (1, TB)
        if w_off != 0.0:
            sum_logits = jnp.sum(logits, axis=0, keepdims=True)
            ce = ce + w_off * (NUM_CLASSES * lse - sum_logits)

        if needs_mask:
            # jnp.where (not multiply): tail-block data is uninitialized and may
            # contain NaN/Inf that would otherwise poison the accumulator.
            col = blk * tb + lax.broadcasted_iota(jnp.int32, ce.shape, 1)
            ce = jnp.where(col < b, ce, 0.0)

        loss_acc[...] += jnp.sum(ce, axis=1, keepdims=True)

        # ---- optional feature regularization --------------------------------
        if has_feat:
            feat = feat_ref[...].astype(jnp.float32)
            d = jnp.abs(feat) - 1.0
            r = jnp.abs(d) if regularization == 1 else d * d
            if needs_mask:
                row = lax.broadcasted_iota(jnp.int32, (feat.shape[0], 1), 0)
                if flat_feats:
                    valid = (blk * rows_per_block + row) < total_feat_rows
                else:
                    valid = (blk * tb + row) < b
                r = jnp.where(valid, r, 0.0)
            reg_acc[...] += jnp.sum(jnp.sum(r, axis=1, keepdims=True),
                                    axis=0, keepdims=True)

        # ---- per-chunk finalize ----------------------------------------------
        @pl.when(s == pl.num_programs(1) - 1)
        def _fini():
            res = loss_acc[...] * inv_b
            if has_feat:
                res = res + reg_scale * reg_acc[...]
            out_ref[...] = jnp.broadcast_to(res, out_ref.shape)   # lane-dense block

    return kernel


@functools.partial(jax.jit, static_argnames=("smooth", "scale", "lam", "eps",
                                              "regularization", "tile_cap"))
def multi_loss(features, output, target, *, smooth=0, scale=3, lam=0.5,
               eps=0.0, regularization=0, tile_cap=None):
    """JAX/Pallas equivalent of Multi_Loss.forward. Returns a scalar f32."""
    if smooth not in (0, 1, 2):
        # TODO(synk): smooth == 3 (randlsr) depends on a torch.rand noise stream
        # that cannot be reproduced exactly — not implemented.
        raise NotImplementedError("smooth == 3 (randlsr) not implemented")

    b, c = output.shape
    assert c == NUM_CLASSES
    has_feat = regularization in (1, 2)

    feats = features.reshape(b, -1)
    f_dim = feats.shape[1]

    # ------------- generation-aware batch-tile sizing --------------------
    vmem_cap = _vmem_capacity_bytes()
    block_budget = int(vmem_cap * 0.40)                 # double-buffered input blocks
    vmem_limit = max(32 * 1024 * 1024,
                     min(int(vmem_cap * 0.75), 96 * 1024 * 1024))

    out_isize = jnp.dtype(output.dtype).itemsize
    feat_isize = jnp.dtype(feats.dtype).itemsize

    flat_hint = has_feat and (b * f_dim) % _LANE == 0
    # per-sample VMEM: double-buffered inputs + in-kernel f32 temporaries
    ce_in = 16 * out_isize + 8 * 4                      # (10,TB)->16 sublanes, (1,TB)->8
    ce_tmp = 4 * 16 * 4 + 6 * 8 * 4                     # ~4 (C,TB) + ~6 (1,TB) f32 temps
    if has_feat:
        f_cols = f_dim if flat_hint else _round_up(f_dim, _LANE)
        feat_in = f_cols * feat_isize
        feat_tmp = 2 * 4 * f_dim
    else:
        feat_in = feat_tmp = 0
    per_sample = 2 * (ce_in + feat_in) + ce_tmp + feat_tmp

    tb_max = max(_LANE, min(_MAX_TB, block_budget // per_sample))
    if tile_cap is not None:
        tb_max = min(tb_max, int(tile_cap))

    if b <= tb_max:
        tb, n_blocks = b, 1
    else:
        tb = max(_LANE, (tb_max // _LANE) * _LANE)
        n_blocks = pl.cdiv(b, tb)
    needs_mask = (b % tb) != 0

    # Lane-dense feature view is only valid if blocks cover whole vreg rows.
    flat_feats = (has_feat and (b * f_dim) % _LANE == 0
                  and (tb * f_dim) % _LANE == 0
                  and (n_blocks == 1 or ((tb * f_dim) // _LANE) % 8 == 0))
    rows_per_block = (tb * f_dim) // _LANE if flat_feats else 0
    total_feat_rows = (b * f_dim) // _LANE if flat_feats else 0

    # Megacore-friendly 2-D grid: (parallel chunks, sequential steps).
    if n_blocks >= 2 and n_blocks % 2 == 0:
        n_par, s_per_chunk = 2, n_blocks // 2
    else:
        n_par, s_per_chunk = 1, n_blocks

    # ------------- layout plumbing (fusable into the input DMA) ----------
    logits_t = jnp.transpose(output)                    # (C, B): classes -> sublanes
    target_2d = target.astype(jnp.int32).reshape(1, b)  # (1, B)

    in_specs = [
        pl.BlockSpec((NUM_CLASSES, tb), lambda p, s: (0, p * s_per_chunk + s)),
        pl.BlockSpec((1, tb), lambda p, s: (0, p * s_per_chunk + s)),
    ]
    args = [logits_t, target_2d]
    if has_feat:
        if flat_feats:
            feat_arg = feats.reshape(-1, _LANE)          # free metadata reshape
            in_specs.append(pl.BlockSpec((rows_per_block, _LANE),
                                         lambda p, s: (p * s_per_chunk + s, 0)))
        else:
            feat_arg = feats
            in_specs.append(pl.BlockSpec((tb, f_dim),
                                         lambda p, s: (p * s_per_chunk + s, 0)))
        args.append(feat_arg)

    kernel = _make_loss_kernel(
        smooth=smooth, scale=scale, eps=float(eps), lam=float(lam),
        regularization=regularization, b=b, f_dim=f_dim, tb=tb,
        s_per_chunk=s_per_chunk, needs_mask=needs_mask, flat_feats=flat_feats,
        rows_per_block=rows_per_block, total_feat_rows=total_feat_rows)

    scratch = [pltpu.VMEM((1, 1), jnp.float32)]          # running loss sum
    if has_feat:
        scratch.append(pltpu.VMEM((1, 1), jnp.float32))  # running reg sum

    bytes_accessed = (b * (NUM_CLASSES * out_isize + 4
                           + (f_dim * feat_isize if has_feat else 0))
                      + n_par * 8 * _LANE * 4)
    cost = pl.CostEstimate(
        flops=b * (8 * NUM_CLASSES + (4 * f_dim if has_feat else 0)),
        transcendentals=b * (NUM_CLASSES + 1),
        bytes_accessed=bytes_accessed)

    partials = pl.pallas_call(
        kernel,
        grid=(n_par, s_per_chunk),
        out_shape=jax.ShapeDtypeStruct((n_par, 8, _LANE), jnp.float32),
        in_specs=in_specs,
        out_specs=pl.BlockSpec((None, 8, _LANE), lambda p, s: (p, 0, 0)),
        scratch_shapes=scratch,
        compiler_params=pltpu.CompilerParams(
            dimension_semantics=("parallel", "arbitrary"),
            allow_input_fusion=[True] * len(args),
            vmem_limit_bytes=vmem_limit),
        cost_estimate=cost,
    )(*args)

    return jnp.sum(partials[:, 0, 0])


def _reference(features, output, target, *, smooth=0, scale=3, lam=0.5,
               eps=0.0, regularization=0):
    """Pure-JAX reference mirroring the PyTorch forward, for sanity check."""
    onehot = jax.nn.one_hot(target, NUM_CLASSES, dtype=jnp.float32)
    total = jnp.sum(onehot, axis=1, keepdims=True)
    if smooth == 0:
        soft = onehot
    elif smooth == 1:
        soft = scale * onehot / total
    elif smooth == 2:
        noise = (jnp.ones_like(onehot) - onehot) / 10.0 * total
        soft = ((1.0 - eps) * onehot / total + eps * noise) * total
    else:
        raise NotImplementedError
    logpt = jax.nn.log_softmax(output.astype(jnp.float32), axis=1)
    loss = -jnp.sum(logpt * soft, axis=1)
    if regularization == 1:
        loss = loss + lam * jnp.mean(jnp.abs(jnp.abs(features) - 1.0))
    elif regularization == 2:
        loss = loss + lam * jnp.mean(jnp.square(jnp.abs(features) - 1.0))
    return jnp.mean(loss)


if __name__ == "__main__":
    key = jax.random.PRNGKey(0)

    configs = [
        dict(smooth=0, regularization=0),
        dict(smooth=1, regularization=1, lam=0.5, scale=3),
        dict(smooth=2, regularization=2, lam=0.5, eps=0.1),
    ]

    # (B, F, tile_cap): exercises single-block, multi-block ragged (1 chunk),
    # even multi-block ragged (2 parallel chunks / v7x megacore path), and the
    # non-lane-dense feature fallback.
    cases = [
        (8, 32, None),
        (640, 32, 256),
        (900, 32, 256),
        (900, 33, 256),
    ]

    for (B, F, cap) in cases:
        k_feat, k_out, k_tgt, key = jax.random.split(key, 4)
        features = jax.random.normal(k_feat, (B, F), dtype=jnp.float32)
        output = jax.random.normal(k_out, (B, NUM_CLASSES), dtype=jnp.float32)
        target = jax.random.randint(k_tgt, (B,), 0, NUM_CLASSES, dtype=jnp.int32)

        for cfg in configs:
            got = multi_loss(features, output, target, tile_cap=cap, **cfg)
            want = _reference(features, output, target, **cfg)
            jax.block_until_ready(got)
            assert jnp.allclose(got, want, rtol=1e-5, atol=1e-5), \
                (B, F, cap, cfg, got, want)

    print("KERNEL_OK")
</pallas_src>

<mosaic_0001>
module attributes {stable_mosaic.version = 11 : i64} {
  func.func @kernel(%arg0: i32, %arg1: i32, %arg2: memref<10x8xf32, #tpu.memory_space<vmem>>, %arg3: memref<1x8xi32, #tpu.memory_space<vmem>>, %arg4: memref<1x8x128xf32, #tpu.memory_space<vmem>>, %arg5: memref<1x1xf32, #tpu.memory_space<vmem>>) attributes {dimension_semantics = [#tpu.dimension_semantics<parallel>, #tpu.dimension_semantics<arbitrary>], iteration_bounds = array<i64: 1, 1>, scalar_prefetch = 0 : i64, scratch_operands = 1 : i64, tpu.core_type = #tpu.core_type<tc>, window_params = [{transform_indices = @transform_0, window_bounds = array<i64: 10, 8>}, {transform_indices = @transform_1, window_bounds = array<i64: 1, 8>}, {transform_indices = @transform_2, window_bounds = array<i64: 1, 8, 128>}]} {
    %c0_i32 = arith.constant 0 : i32
    %0 = arith.cmpi eq, %arg1, %c0_i32 : i32
    %1 = arith.extui %0 : i1 to i32
    %c0_i32_0 = arith.constant 0 : i32
    %2 = arith.cmpi ne, %1, %c0_i32_0 : i32
    scf.if %2 {
      %cst_14 = arith.constant 0.000000e+00 : f32
      %33 = vector.broadcast %cst_14 : f32 to vector<1x1xf32>
      %c0_15 = arith.constant 0 : index
      %c0_16 = arith.constant 0 : index
      %34 = vector.load %arg5[%c0_15, %c0_16] : memref<1x1xf32, #tpu.memory_space<vmem>>, vector<1x1xf32>
      tpu.vector_store %arg5[%c0_15, %c0_16], %33 {strides = array<i32>} : memref<1x1xf32, #tpu.memory_space<vmem>>, vector<1x1xf32>,
    } else {
    }
    %c0 = arith.constant 0 : index
    %c0_1 = arith.constant 0 : index
    %3 = vector.load %arg2[%c0, %c0_1] : memref<10x8xf32, #tpu.memory_space<vmem>>, vector<10x8xf32>
    %c0_2 = arith.constant 0 : index
    %c0_3 = arith.constant 0 : index
    %4 = vector.load %arg3[%c0_2, %c0_3] : memref<1x8xi32, #tpu.memory_space<vmem>>, vector<1x8xi32>
    %5 = tpu.iota {dimensions = array<i32: 0>} : vector<10x8xi32>
    %6 = vector.broadcast %4 : vector<1x8xi32> to vector<10x8xi32>
    %7 = arith.cmpi eq, %5, %6 : vector<10x8xi32>
    %8 = arith.extui %7 : vector<10x8xi1> to vector<10x8xi32>
    %9 = arith.sitofp %8 : vector<10x8xi32> to vector<10x8xf32>
    %cst = arith.constant dense<0xFF800000> : vector<8xf32>
    %10 = vector.multi_reduction <maximumf>, %3, %cst [0] : vector<10x8xf32> to vector<8xf32>
    %11 = vector.shape_cast %10 : vector<8xf32> to vector<1x8xf32>
    %12 = vector.broadcast %11 : vector<1x8xf32> to vector<10x8xf32>
    %13 = arith.subf %3, %12 : vector<10x8xf32>
    %14 = math.exp %13 : vector<10x8xf32>
    %cst_4 = arith.constant dense<0.000000e+00> : vector<8xf32>
    %15 = vector.multi_reduction <add>, %14, %cst_4 [0] : vector<10x8xf32> to vector<8xf32>
    %16 = vector.shape_cast %15 : vector<8xf32> to vector<1x8xf32>
    %17 = math.log %16 : vector<1x8xf32>
    %18 = arith.addf %11, %17 : vector<1x8xf32>
    %19 = arith.mulf %3, %9 : vector<10x8xf32>
    %cst_5 = arith.constant dense<0.000000e+00> : vector<8xf32>
    %20 = vector.multi_reduction <add>, %19, %cst_5 [0] : vector<10x8xf32> to vector<8xf32>
    %21 = vector.shape_cast %20 : vector<8xf32> to vector<1x8xf32>
    %22 = arith.subf %18, %21 : vector<1x8xf32>
    %cst_6 = arith.constant 1.000000e+00 : f32
    %23 = vector.broadcast %cst_6 : f32 to vector<1x8xf32>
    %24 = arith.mulf %23, %22 : vector<1x8xf32>
    %c0_7 = arith.constant 0 : index
    %c0_8 = arith.constant 0 : index
    %25 = vector.load %arg5[%c0_7, %c0_8] : memref<1x1xf32, #tpu.memory_space<vmem>>, vector<1x1xf32>
    %cst_9 = arith.constant dense<0.000000e+00> : vector<1xf32>
    %26 = vector.multi_reduction <add>, %24, %cst_9 [1] : vector<1x8xf32> to vector<1xf32>
    %27 = vector.shape_cast %26 : vector<1xf32> to vector<1x1xf32>
    %28 = arith.addf %25, %27 : vector<1x1xf32>
    %c0_10 = arith.constant 0 : index
    %c0_11 = arith.constant 0 : index
    %29 = vector.load %arg5[%c0_10, %c0_11] : memref<1x1xf32, #tpu.memory_space<vmem>>, vector<1x1xf32>
    tpu.vector_store %arg5[%c0_10, %c0_11], %28 {strides = array<i32>} : memref<1x1xf32, #tpu.memory_space<vmem>>, vector<1x1xf32>,
    %c0_i32_12 = arith.constant 0 : i32
    %30 = arith.cmpi eq, %arg1, %c0_i32_12 : i32
    %31 = arith.extui %30 : i1 to i32
    %c0_i32_13 = arith.constant 0 : i32
    %32 = arith.cmpi ne, %31, %c0_i32_13 : i32
    scf.if %32 {
      %c0_14 = arith.constant 0 : index
      %c0_15 = arith.constant 0 : index
      %33 = vector.load %arg5[%c0_14, %c0_15] : memref<1x1xf32, #tpu.memory_space<vmem>>, vector<1x1xf32>
      %cst_16 = arith.constant 1.250000e-01 : f32
      %34 = vector.broadcast %cst_16 : f32 to vector<1x1xf32>
      %35 = arith.mulf %33, %34 : vector<1x1xf32>
      %36 = vector.shape_cast %35 : vector<1x1xf32> to vector<1x1xf32>
      %37 = vector.broadcast %36 : vector<1x1xf32> to vector<8x128xf32>
      %c0_17 = arith.constant 0 : index
      %c0_18 = arith.constant 0 : index
      %c0_19 = arith.constant 0 : index
      %38 = vector.load %arg4[%c0_17, %c0_18, %c0_19] : memref<1x8x128xf32, #tpu.memory_space<vmem>>, vector<1x8x128xf32>
      %39 = vector.shape_cast %38 : vector<1x8x128xf32> to vector<8x128xf32>
      %40 = vector.shape_cast %37 : vector<8x128xf32> to vector<1x8x128xf32>
      tpu.vector_store %arg4[%c0_17, %c0_18, %c0_19], %40 {strides = array<i32>} : memref<1x8x128xf32, #tpu.memory_space<vmem>>, vector<1x8x128xf32>,
    } else {
    }
    return
  }
  func.func @transform_0(%arg0: i32, %arg1: i32) -> (i32, i32) {
    %c1_i32 = arith.constant 1 : i32
    %0 = arith.muli %arg0, %c1_i32 : i32
    %1 = arith.addi %0, %arg1 : i32
    %c0_i32 = arith.constant 0 : i32
    %c0_i32_0 = arith.constant 0 : i32
    return %c0_i32, %1 : i32, i32
  }
  func.func @transform_1(%arg0: i32, %arg1: i32) -> (i32, i32) {
    %c1_i32 = arith.constant 1 : i32
    %0 = arith.muli %arg0, %c1_i32 : i32
    %1 = arith.addi %0, %arg1 : i32
    %c0_i32 = arith.constant 0 : i32
    %c0_i32_0 = arith.constant 0 : i32
    return %c0_i32, %1 : i32, i32
  }
  func.func @transform_2(%arg0: i32, %arg1: i32) -> (i32, i32, i32) {
    %c0_i32 = arith.constant 0 : i32
    %c0_i32_0 = arith.constant 0 : i32
    %c0_i32_1 = arith.constant 0 : i32
    return %arg0, %c0_i32, %c0_i32_0 : i32, i32, i32
  }
}

</mosaic_0001>

<llo_original>
// kernel: multi_loss.2
$region0: #{multi_loss.2}
  #allocation0 [shape = 'u32[]', space=smem, size = 0x4, offset = 0x4, fixed_abs, tag = 'smem constant byte address 0x4 - core index']
  #allocation1 [shape = 'u32[144,128]{1,0:T(1,128)}', space=vmem, size = 0x12000, scoped, tag = 'internal scratch']
  #allocation2 [shape = 'f32[1,1]{1,0:T(1,128)}', space=vmem, size = 0x200, scoped, tag = 'scratch operand']
  %s0 = inlined_call_operand.vmem [shape: f32[8,10], index: 0, kind: input, shape index: {}]
  %s1 = inlined_call_operand.vmem [shape: s32[8], index: 1, kind: input, shape index: {}]
  %s2 = inlined_call_operand.vmem [shape: f32[1,8,128], index: 2, kind: output, shape index: {}]
  %s3 = sld [smem:[#allocation0]]
  $region26: #{multi_loss.2} parent=0
    _
  %s5 = ssub.s32 1, %s3
  %s6 = scalar_select 0, %s5, %s3
  $region1: #{multi_loss.2} parent=0
    #allocation3 [shape = 'u8[8192]{0}', space=vmem, size = 0x2000, dematerialized = true, scoped, tag = 'FusionAdapter Buffer %fusion.1 = f32[10,8]{1,0:T(8,128)} fusion(%param_0.3), kind=kLoop, calls=%fused_computation.1.clone, metadata={op_name="jit(multi_loss)/transpose" stack_frame_id=8}']
    #allocation4 [shape = 'u8[512]{0}', space=vmem, size = 0x400, dematerialized = true, scoped, tag = 'FusionAdapter Buffer %fusion.2 = s32[1,8]{1,0:T(1,128)} fusion(%param_1.2), kind=kLoop, calls=%fused_computation.2.clone, metadata={op_name="jit(multi_loss)/reshape" stack_frame_id=9}']
    // Predicated region
    $region2: #{multi_loss.2} parent=1 // pred_check
      _
    $region3: #{multi_loss.2} parent=1 // pred_check_branch
      %8 = sbr.rel (0) target = $region5
    $region4: #{multi_loss.2} parent=1 // pred_region
      %s9 = sadd.s32 0, 0
      %p10 = scmp.lt.s32.totalorder %s9, 0
      %s11 = scalar_select %p10, %s9, 0
      %s12 = smul.addr %s11, 8
      %s13 = scalar_lea.vmem %s0, %s12
      %s14 = sadd.s32 0, 0
    $region5: #{multi_loss.2} parent=1 // pred_fallthru
      _
    // Predicated region
    $region6: #{multi_loss.2} parent=1 // pred_check
      _
    $region7: #{multi_loss.2} parent=1 // pred_check_branch
      %16 = sbr.rel (0) target = $region9
    $region8: #{multi_loss.2} parent=1 // pred_region
      %s17 = sadd.s32 0, 0
      %p18 = scmp.lt.s32.totalorder %s17, 0
      %s19 = scalar_select %p18, %s17, 0
      %s20 = scalar_lea.vmem %s1, %s19
      %s21 = sadd.s32 0, 0
    $region9: #{multi_loss.2} parent=1 // pred_fallthru
      _
    %s22 = sadd.s32 0, 0
    %p23 = scmp.lt.s32.totalorder %s22, 0
    %s24 = scalar_select %p23, %s22, 0
    %s25 = smul.addr %s24, 8
    %s26 = scalar_lea.vmem %s0, %s25
    %s27 = sadd.s32 0, 0
    %p28 = scmp.lt.s32.totalorder %s27, 0
    %s29 = scalar_select %p28, %s27, 0
    %s30 = scalar_lea.vmem %s1, %s29
    %s31 = sadd.s32 0, 0
    %p32 = scmp.lt.s32.totalorder %s31, 0
    %s33 = scalar_select %p32, %s31, 0
    %s34 = smul.addr %s33, 8
    %s35 = scalar_lea.vmem %s0, %s34
    %s36 = sadd.s32 0, 0
    %s37 = sadd.s32 0, 0
    %p38 = scmp.lt.s32.totalorder %s37, 0
    %s39 = scalar_select %p38, %s37, 0
    %s40 = scalar_lea.vmem %s1, %s39
    %s41 = sadd.s32 0, 0
    %v42 = vld [vmem:[%s35] sm:$0xff]
    %44 = vst [vmem:[#allocation3] sm:$0xff] %v42
    %s45 = scalar_lea.vmem %s35, 8
    %v46 = vld [vmem:[%s45] sm:$0xff]
    %s47 = scalar_lea.vmem [#allocation3], 8
    %49 = vst [vmem:[%s47] sm:$0xff] %v46
    %v50 = vld [vmem:[%s40] sm:$0x1]
    %52 = vst [vmem:[#allocation4] sm:$0x1] %v50
    %p53 = scmp.eq.s32.totalorder 0, 0
    // Predicated region
    $region10: #{multi_loss.2} parent=1 // pred_check
      %p54 = pneg %p53
    $region11: #{multi_loss.2} parent=1 // pred_check_branch
      %56 = sbr.rel (%p54) target = $region13
    $region12: #{multi_loss.2} parent=1 // pred_region
      %vm57 = vcmask 0
      %58 = vst.msk [vmem:[#allocation2] sm:$0x1] %vm57, 0.0
    $region13: #{multi_loss.2} parent=1 // pred_fallthru
      _
    %v59 = vld [vmem:[#allocation3] sm:$0xff]
    %v60 = vld [vmem:[#allocation3 + $0x8] sm:$0x3]
    %v61 = vld [vmem:[#allocation4] sm:$0x1]
    %v62 = vlaneseq
    %v63 = vshrl.u32 %v62, 7
    %v64 = vadd.s32 %v63, 8
    %v65 = vlaneseq
    %v66 = vshrl.u32 %v65, 7
    %v67 = vsub.s32 0, %v66
    %v68 = vrot.slane %v61, %v67
    %vm69 = vcmp.eq.s32.totalorder %v63, %v68
    %vm70 = vcmp.eq.s32.totalorder %v64, %v68
    %v71 = vsel %vm69, 1, 0
    %v72 = vsel %vm70, 1, 0
    %v73 = vcvt.s32.f32 %v71
    %v74 = vcvt.s32.f32 %v72
    %vm75 = vcmask 64512
    %v76 = vsel %vm75, %v59, -inf
    %vm77 = vcmask 58368
    %v78 = vsel %vm77, %v60, -inf
    %v79 = vmax.f32 %v76, %v78
    %v80 = vrot.slane %v79, 4
    %v81 = vmax.f32 %v79, %v80
    %v82 = vrot.slane %v81, 2
    %v83 = vmax.f32 %v81, %v82
    %v84 = vrot.slane %v83, 1
    %v85 = vmax.f32 %v83, %v84
    %v86 = vsub.f32 %v59, %v85
    %v87 = vsub.f32 %v60, %v85
    %v88 = vmul.f32 %v86, 1.442695
    %v89 = vpow.pop %v88
    %v90 = vmul.f32 %v87, 1.442695
    %v91 = vpow.pop %v90
    %v92 = vsel %vm75, %v89, 0.0
    %v93 = vsel %vm77, %v91, 0.0
    %v94 = vadd.f32 %v92, %v93
    %v95 = vrot.slane %v94, 4
    %v96 = vadd.f32 %v94, %v95
    %v97 = vrot.slane %v96, 2
    %v98 = vadd.f32 %v96, %v97
    %v99 = vrot.slane %v98, 1
    %v100 = vadd.f32 %v98, %v99
    %v101 = vlog2.pop %v100
    %v102 = vmul.f32 %v101, 0.6931472
    %v103 = vadd.f32 %v85, %v102
    %v104 = vmul.f32 %v59, %v73
    %v105 = vmul.f32 %v60, %v74
    %v106 = vsel %vm75, %v104, 0.0
    %v107 = vsel %vm77, %v105, 0.0
    %v108 = vadd.f32 %v106, %v107
    %v109 = vrot.slane %v108, 4
    %v110 = vadd.f32 %v108, %v109
    %v111 = vrot.slane %v110, 2
    %v112 = vadd.f32 %v110, %v111
    %v113 = vrot.slane %v112, 1
    %v114 = vadd.f32 %v112, %v113
    %v115 = vsub.f32 %v103, %v114
    %v116 = vld [vmem:[#allocation2] sm:$0x1]
    %v117 = vsel %vm75, %v115, 0.0
    %118 = vadd.xlane.f32.xlu0 %v117
    %v119 = vpop.xlane.xlu0 %118
    %v120 = vadd.f32 %v116, %v119
    %vm121 = vcmask 0
    %122 = vst.msk [vmem:[#allocation2] sm:$0x1] %vm121, %v120
    // Predicated region
    $region14: #{multi_loss.2} parent=1 // pred_check
      %p123 = pneg %p53
    $region15: #{multi_loss.2} parent=1 // pred_check_branch
      %125 = sbr.rel (%p123) target = $region17
    $region16: #{multi_loss.2} parent=1 // pred_region
      %v126 = vld [vmem:[#allocation2] sm:$0x1]
      %v127 = vmul.f32 %v126, 0.125
      %v129 = vlaneseq
      %v130 = vshrl.u32 %v129, 7
      %v131 = vsub.s32 0, %v130
      %v132 = vrot.slane %v127, %v131
      %133 = vset.pattern.permute.xlu0 0
      %134 = vperm.xlu0 %133, %v132
      %v135 = vpop.permute.xlu0 %134
      %137 = vst [vmem:[%s2] sm:$0xff] %v135
    $region17: #{multi_loss.2} parent=1 // pred_fallthru
      _
    // Predicated region
    $region18: #{multi_loss.2} parent=1 // pred_check
      _
    $region19: #{multi_loss.2} parent=1 // pred_check_branch
      %139 = sbr.rel (0) target = $region21
    $region20: #{multi_loss.2} parent=1 // pred_region
      _
    $region21: #{multi_loss.2} parent=1 // pred_fallthru
      _
    // Predicated region
    $region22: #{multi_loss.2} parent=1 // pred_check
      _
    $region23: #{multi_loss.2} parent=1 // pred_check_branch
      %141 = sbr.rel (0) target = $region25
    $region24: #{multi_loss.2} parent=1 // pred_region
      _
    $region25: #{multi_loss.2} parent=1 // pred_fallthru
      _

</llo_original>
